<compile_context>
chip_gen: v6e
topology: v6e:2x2x1
jax: 0.10.0
libtpu: 0.0.40
codegen_flags: <defaults>
</compile_context>

<pallas_src>
import numpy as np
import jax
import jax.numpy as jnp
from jax import lax
from jax.experimental import pallas as pl
from jax.experimental.pallas import tpu as pltpu


# ----------------------------------------------------------------------------
# Generation-aware VMEM budget (v5e/v6e: 128 MiB physical, v7x: 64 MiB).
# ----------------------------------------------------------------------------
def _vmem_limit_bytes():
    cap = 128 * 1024 * 1024
    try:
        info = pltpu.get_tpu_info()
        cap = int(getattr(info, "vmem_capacity_bytes", cap) or cap)
    except Exception:
        pass
    if cap <= 64 * 1024 * 1024:        # v7x-class: leave headroom under 64 MiB
        return 40 * 1024 * 1024
    return 96 * 1024 * 1024            # v5e / v6e class


_VMEM_LIMIT = _vmem_limit_bytes()


def _round_up(x, m):
    return ((x + m - 1) // m) * m


def _pick_tile(dim, target, granule):
    """Largest tile <= target that divides `dim` and is a multiple of `granule`.

    Falls back to the full dimension, which is always a legal Pallas block
    (block extent == full array extent satisfies the (8, 128) rule).
    """
    t = min(target, dim)
    t = (t // granule) * granule
    while t >= granule:
        if dim % t == 0:
            return t
        t -= granule
    return dim


# ----------------------------------------------------------------------------
# Fused Q/K/V projection: x (M, K) is read once per tile and used for three
# MXU matmuls; three f32 accumulators, K-axis init/finalize via pl.when.
# ----------------------------------------------------------------------------
def _qkv_proj_kernel(x_ref, wq_ref, wk_ref, wv_ref, bq_ref, bk_ref, bv_ref,
                     q_ref, k_ref, v_ref, qacc, kacc, vacc):
    kk = pl.program_id(2)

    @pl.when(kk == 0)
    def _():
        qacc[...] = jnp.zeros_like(qacc)
        kacc[...] = jnp.zeros_like(kacc)
        vacc[...] = jnp.zeros_like(vacc)

    x = x_ref[...]                              # (tm, tk) bf16
    qacc[...] += jnp.dot(x, wq_ref[...], preferred_element_type=jnp.float32)
    kacc[...] += jnp.dot(x, wk_ref[...], preferred_element_type=jnp.float32)
    vacc[...] += jnp.dot(x, wv_ref[...], preferred_element_type=jnp.float32)

    @pl.when(kk == pl.num_programs(2) - 1)
    def _():
        q_ref[...] = (qacc[...] + bq_ref[...]).astype(q_ref.dtype)
        k_ref[...] = (kacc[...] + bk_ref[...]).astype(k_ref.dtype)
        v_ref[...] = (vacc[...] + bv_ref[...]).astype(v_ref.dtype)


def qkv_project(x, wq, wk, wv, bq, bk, bv, *, out_dtype=jnp.bfloat16,
                tm_target=512, tn_target=512, tk_target=512):
    M, K = x.shape
    N = wq.shape[1]

    tm = min(tm_target, _round_up(M, 8))
    Mp = _round_up(M, tm)
    tn = _pick_tile(N, tn_target, 128)
    tk = _pick_tile(K, tk_target, 128)
    if Mp != M:
        x = jnp.pad(x, ((0, Mp - M), (0, 0)))

    x_spec = pl.BlockSpec((tm, tk), lambda i, j, k: (i, k))
    w_spec = pl.BlockSpec((tk, tn), lambda i, j, k: (k, j))
    b_spec = pl.BlockSpec((1, tn), lambda i, j, k: (0, j))
    o_spec = pl.BlockSpec((tm, tn), lambda i, j, k: (i, j))

    q, k_, v = pl.pallas_call(
        _qkv_proj_kernel,
        out_shape=tuple(jax.ShapeDtypeStruct((Mp, N), out_dtype)
                        for _ in range(3)),
        grid=(Mp // tm, N // tn, K // tk),
        in_specs=[x_spec, w_spec, w_spec, w_spec, b_spec, b_spec, b_spec],
        out_specs=[o_spec, o_spec, o_spec],
        scratch_shapes=[
            pltpu.VMEM((tm, tn), jnp.float32),
            pltpu.VMEM((tm, tn), jnp.float32),
            pltpu.VMEM((tm, tn), jnp.float32),
        ],
        compiler_params=pltpu.CompilerParams(
            dimension_semantics=("parallel", "parallel", "arbitrary"),
            vmem_limit_bytes=_VMEM_LIMIT,
        ),
    )(x, wq, wk, wv, bq, bk, bv)
    if Mp != M:
        q, k_, v = q[:M], k_[:M], v[:M]
    return q, k_, v


# ----------------------------------------------------------------------------
# Generic tiled dense layer (used for the output projection).
# ----------------------------------------------------------------------------
def _linear_kernel(x_ref, w_ref, b_ref, o_ref, acc_ref):
    kk = pl.program_id(2)

    @pl.when(kk == 0)
    def _():
        acc_ref[...] = jnp.zeros_like(acc_ref)

    acc_ref[...] += jnp.dot(x_ref[...], w_ref[...],
                            preferred_element_type=jnp.float32)

    @pl.when(kk == pl.num_programs(2) - 1)
    def _():
        o_ref[...] = (acc_ref[...] + b_ref[...]).astype(o_ref.dtype)


def linear(x, w, b, *, out_dtype=jnp.float32,
           tm_target=512, tn_target=512, tk_target=512):
    M, K = x.shape
    N = w.shape[1]

    tm = min(tm_target, _round_up(M, 8))
    Mp = _round_up(M, tm)
    tn = _pick_tile(N, tn_target, 128)
    tk = _pick_tile(K, tk_target, 128)
    if Mp != M:
        x = jnp.pad(x, ((0, Mp - M), (0, 0)))

    out = pl.pallas_call(
        _linear_kernel,
        out_shape=jax.ShapeDtypeStruct((Mp, N), out_dtype),
        grid=(Mp // tm, N // tn, K // tk),
        in_specs=[
            pl.BlockSpec((tm, tk), lambda i, j, k: (i, k)),
            pl.BlockSpec((tk, tn), lambda i, j, k: (k, j)),
            pl.BlockSpec((1, tn), lambda i, j, k: (0, j)),
        ],
        out_specs=pl.BlockSpec((tm, tn), lambda i, j, k: (i, j)),
        scratch_shapes=[pltpu.VMEM((tm, tn), jnp.float32)],
        compiler_params=pltpu.CompilerParams(
            dimension_semantics=("parallel", "parallel", "arbitrary"),
            vmem_limit_bytes=_VMEM_LIMIT,
        ),
    )(x, w, b)
    return out[:M] if Mp != M else out


# ----------------------------------------------------------------------------
# Flash-style attention: online softmax over KV blocks, heads as a grid axis.
# q is pre-scaled by 1/sqrt(depth) (folded into Wq); bias already * -1e4.
# ----------------------------------------------------------------------------
def _flash_kernel(bias_ref, q_ref, k_ref, v_ref, o_ref, m_sc, l_sc, acc_sc):
    ki = pl.program_id(3)

    @pl.when(ki == 0)
    def _():
        m_sc[...] = jnp.full_like(m_sc, -jnp.inf)
        l_sc[...] = jnp.zeros_like(l_sc)
        acc_sc[...] = jnp.zeros_like(acc_sc)

    q = q_ref[0, 0]                          # (tq, depth) bf16
    k = k_ref[0, 0]                          # (tk, depth) bf16
    v = v_ref[0, 0]                          # (tk, depth) bf16

    # Contract over depth (no k.T materialization), f32 logits on the MXU.
    s = lax.dot_general(q, k, (((1,), (1,)), ((), ())),
                        preferred_element_type=jnp.float32)      # (tq, tk)
    s = s + bias_ref[...]                    # additive mask bias (f32)

    m_prev = m_sc[...]                                           # (tq, 1)
    m_new = jnp.maximum(m_prev, jnp.max(s, axis=-1, keepdims=True))
    alpha = jnp.exp(m_prev - m_new)
    p = jnp.exp(s - m_new)                                       # unnormalized
    l_sc[...] = alpha * l_sc[...] + jnp.sum(p, axis=-1, keepdims=True)
    acc_sc[...] = alpha * acc_sc[...] + jnp.dot(
        p.astype(v.dtype), v, preferred_element_type=jnp.float32)
    m_sc[...] = m_new

    @pl.when(ki == pl.num_programs(3) - 1)
    def _():
        # Deferred softmax normalization on (tq, depth) via the EUP.
        inv_l = pl.reciprocal(l_sc[...], approx=True)
        o_ref[0, 0] = (acc_sc[...] * inv_l).astype(o_ref.dtype)


def flash_attention(q, k, v, mask_bias, *, tq_target=256, tk_target=512):
    """q/k/v: (B, H, S, depth) bf16; mask_bias: (S, S) f32 additive bias."""
    B, H, S, depth = q.shape
    tq = _pick_tile(S, tq_target, 8)
    tk = _pick_tile(S, tk_target, 128)
    # TODO(synk): for S that is not a multiple of 128 and very large, pad the
    # sequence (with bias = -1e4) instead of falling back to full-S KV tiles.

    q_spec = pl.BlockSpec((1, 1, tq, depth), lambda b, h, qi, ki: (b, h, qi, 0))
    kv_spec = pl.BlockSpec((1, 1, tk, depth), lambda b, h, qi, ki: (b, h, ki, 0))
    bias_spec = pl.BlockSpec((tq, tk), lambda b, h, qi, ki: (qi, ki))
    out_spec = pl.BlockSpec((1, 1, tq, depth), lambda b, h, qi, ki: (b, h, qi, 0))

    return pl.pallas_call(
        _flash_kernel,
        out_shape=jax.ShapeDtypeStruct((B, H, S, depth), q.dtype),
        grid=(B, H, S // tq, S // tk),
        in_specs=[bias_spec, q_spec, kv_spec, kv_spec],
        out_specs=out_spec,
        scratch_shapes=[
            pltpu.VMEM((tq, 1), jnp.float32),        # running max
            pltpu.VMEM((tq, 1), jnp.float32),        # running sum
            pltpu.VMEM((tq, depth), jnp.float32),    # output accumulator
        ],
        compiler_params=pltpu.CompilerParams(
            dimension_semantics=("parallel", "parallel", "parallel", "arbitrary"),
            vmem_limit_bytes=_VMEM_LIMIT,
        ),
    )(mask_bias, q, k, v)


# ----------------------------------------------------------------------------
# Full module forward.
# ----------------------------------------------------------------------------
class MultiHeadAttentionPallas:
    def __init__(self, d_model_size, num_heads, key):
        assert d_model_size % num_heads == 0
        self.num_heads = num_heads
        self.d_model_size = d_model_size
        self.depth = d_model_size // num_heads

        # Deterministic synthetic parameters.  Weights stored as (in, out) and
        # applied as x @ W + b (equivalent to torch Linear with W := W_t.T).
        ks = jax.random.split(key, 8)
        scale = 1.0 / np.sqrt(d_model_size)

        def w(k):
            return (jax.random.normal(k, (d_model_size, d_model_size),
                                      jnp.float32) * scale)

        def b(k):
            return jax.random.normal(k, (d_model_size,), jnp.float32) * scale

        self.Wq_w, self.Wq_b = w(ks[0]), b(ks[1])
        self.Wk_w, self.Wk_b = w(ks[2]), b(ks[3])
        self.Wv_w, self.Wv_b = w(ks[4]), b(ks[5])
        self.Wo_w, self.Wo_b = w(ks[6]), b(ks[7])

        # Kernel-side parameters: bf16 weights (MXU-native), f32 biases.
        # The attention scale 1/sqrt(depth) is folded into Wq/bq at init.
        inv_sqrt_dk = np.float32(1.0 / np.sqrt(self.depth))
        self.Wq_bf = (self.Wq_w * inv_sqrt_dk).astype(jnp.bfloat16)
        self.Wk_bf = self.Wk_w.astype(jnp.bfloat16)
        self.Wv_bf = self.Wv_w.astype(jnp.bfloat16)
        self.Wo_bf = self.Wo_w.astype(jnp.bfloat16)
        self.bq_s = (self.Wq_b * inv_sqrt_dk).reshape(1, -1)
        self.bk_r = self.Wk_b.reshape(1, -1)
        self.bv_r = self.Wv_b.reshape(1, -1)
        self.bo_r = self.Wo_b.reshape(1, -1)

    def __call__(self, hidden_state, mask):
        B, S, D = hidden_state.shape
        H, depth = self.num_heads, self.depth

        x2d = hidden_state.reshape(B * S, D).astype(jnp.bfloat16)

        # Fused Q/K/V projection: x streamed from HBM once, 3 matmuls per tile.
        q2d, k2d, v2d = qkv_project(x2d, self.Wq_bf, self.Wk_bf, self.Wv_bf,
                                    self.bq_s, self.bk_r, self.bv_r)

        # Head-major layout (B, H, S, depth): every per-head block has `depth`
        # as its full minor dim, so all kernel slices/stores are lane-aligned.
        # TODO(synk): when depth % 128 == 0, emit this layout (and the merged
        # (B, S, D) attention output) directly from the kernels' out_specs to
        # remove these XLA-side transposes.
        def to_heads(t):
            return jnp.transpose(t.reshape(B, S, H, depth), (0, 2, 1, 3))

        q, k, v = to_heads(q2d), to_heads(k2d), to_heads(v2d)

        # Module semantics: additive bias  mask[ns-nd:ns, :ns] * -1e4.
        nd = ns = S
        mask_bias = mask[ns - nd:ns, :ns].astype(jnp.float32) * (-10000.0)

        attn = flash_attention(q, k, v, mask_bias)        # (B, H, S, depth)
        attn2d = jnp.transpose(attn, (0, 2, 1, 3)).reshape(B * S, D)

        # TODO(synk): fuse this output projection into the attention epilogue
        # (per q-tile, Wo resident in VMEM) to save one (B,S,D) HBM round trip.
        out = linear(attn2d, self.Wo_bf, self.bo_r, out_dtype=jnp.float32)
        return out.reshape(B, S, D)


# ----------------------------------------------------------------------------
# Pure-JAX f32 reference (matches the PyTorch module).
# ----------------------------------------------------------------------------
def reference_forward(mha, hidden_state, mask):
    B, S, D = hidden_state.shape
    q = hidden_state @ mha.Wq_w + mha.Wq_b
    k = hidden_state @ mha.Wk_w + mha.Wk_b
    v = hidden_state @ mha.Wv_w + mha.Wv_b

    def split(x):
        return jnp.transpose(x.reshape(B, S, mha.num_heads, mha.depth),
                             (0, 2, 1, 3))

    q, k, v = split(q), split(k), split(v)
    logits = jnp.einsum("bhqd,bhkd->bhqk", q, k) / np.sqrt(mha.depth)
    logits = logits + mask[:S, :S] * -10000.0
    w = jax.nn.softmax(logits, axis=-1)
    attn = jnp.einsum("bhqk,bhkd->bhqd", w, v)
    attn = jnp.transpose(attn, (0, 2, 1, 3)).reshape(B, S, D)
    return attn @ mha.Wo_w + mha.Wo_b


if __name__ == "__main__":
    B, S, D, H = 2, 8, 32, 4

    key = jax.random.PRNGKey(0)
    k_param, k_x = jax.random.split(key)

    mha = MultiHeadAttentionPallas(D, H, k_param)

    hidden_state = jax.random.normal(k_x, (B, S, D), jnp.float32)
    # CTRL-style causal mask: 1 where future positions should be masked.
    mask = jnp.triu(jnp.ones((S, S), jnp.float32), k=1)

    out = jax.block_until_ready(mha(hidden_state, mask))

    # bf16 MXU operands (f32 accumulation) -> loosened parity tolerance.
    ref = reference_forward(mha, hidden_state, mask)
    np.testing.assert_allclose(np.asarray(out), np.asarray(ref),
                               rtol=1e-1, atol=1e-1)

    print("KERNEL_OK")
</pallas_src>

<mosaic_0001>
module attributes {stable_mosaic.version = 11 : i64} {
  func.func @_qkv_proj_kernel(%arg0: i32, %arg1: i32, %arg2: i32, %arg3: memref<16x32xbf16, #tpu.memory_space<vmem>>, %arg4: memref<32x32xbf16, #tpu.memory_space<vmem>>, %arg5: memref<32x32xbf16, #tpu.memory_space<vmem>>, %arg6: memref<32x32xbf16, #tpu.memory_space<vmem>>, %arg7: memref<1x32xf32, #tpu.memory_space<vmem>>, %arg8: memref<1x32xf32, #tpu.memory_space<vmem>>, %arg9: memref<1x32xf32, #tpu.memory_space<vmem>>, %arg10: memref<16x32xbf16, #tpu.memory_space<vmem>>, %arg11: memref<16x32xbf16, #tpu.memory_space<vmem>>, %arg12: memref<16x32xbf16, #tpu.memory_space<vmem>>, %arg13: memref<16x32xf32, #tpu.memory_space<vmem>>, %arg14: memref<16x32xf32, #tpu.memory_space<vmem>>, %arg15: memref<16x32xf32, #tpu.memory_space<vmem>>) attributes {dimension_semantics = [#tpu.dimension_semantics<parallel>, #tpu.dimension_semantics<parallel>, #tpu.dimension_semantics<arbitrary>], iteration_bounds = array<i64: 1, 1, 1>, scalar_prefetch = 0 : i64, scratch_operands = 3 : i64, tpu.core_type = #tpu.core_type<tc>, window_params = [{transform_indices = @transform_0, window_bounds = array<i64: 16, 32>}, {transform_indices = @transform_1, window_bounds = array<i64: 32, 32>}, {transform_indices = @transform_2, window_bounds = array<i64: 32, 32>}, {transform_indices = @transform_3, window_bounds = array<i64: 32, 32>}, {transform_indices = @transform_4, window_bounds = array<i64: 1, 32>}, {transform_indices = @transform_5, window_bounds = array<i64: 1, 32>}, {transform_indices = @transform_6, window_bounds = array<i64: 1, 32>}, {transform_indices = @transform_7, window_bounds = array<i64: 16, 32>}, {transform_indices = @transform_8, window_bounds = array<i64: 16, 32>}, {transform_indices = @transform_9, window_bounds = array<i64: 16, 32>}]} {
    %c0_i32 = arith.constant 0 : i32
    %0 = arith.cmpi eq, %arg2, %c0_i32 : i32
    %1 = arith.extui %0 : i1 to i32
    %c0_i32_0 = arith.constant 0 : i32
    %2 = arith.cmpi ne, %1, %c0_i32_0 : i32
    scf.if %2 {
      %cst_24 = arith.constant 0.000000e+00 : f32
      %22 = vector.broadcast %cst_24 : f32 to vector<16x32xf32>
      %c0_25 = arith.constant 0 : index
      %c0_26 = arith.constant 0 : index
      %23 = vector.load %arg13[%c0_25, %c0_26] : memref<16x32xf32, #tpu.memory_space<vmem>>, vector<16x32xf32>
      tpu.vector_store %arg13[%c0_25, %c0_26], %22 {strides = array<i32>} : memref<16x32xf32, #tpu.memory_space<vmem>>, vector<16x32xf32>,
      %cst_27 = arith.constant 0.000000e+00 : f32
      %24 = vector.broadcast %cst_27 : f32 to vector<16x32xf32>
      %c0_28 = arith.constant 0 : index
      %c0_29 = arith.constant 0 : index
      %25 = vector.load %arg14[%c0_28, %c0_29] : memref<16x32xf32, #tpu.memory_space<vmem>>, vector<16x32xf32>
      tpu.vector_store %arg14[%c0_28, %c0_29], %24 {strides = array<i32>} : memref<16x32xf32, #tpu.memory_space<vmem>>, vector<16x32xf32>,
      %cst_30 = arith.constant 0.000000e+00 : f32
      %26 = vector.broadcast %cst_30 : f32 to vector<16x32xf32>
      %c0_31 = arith.constant 0 : index
      %c0_32 = arith.constant 0 : index
      %27 = vector.load %arg15[%c0_31, %c0_32] : memref<16x32xf32, #tpu.memory_space<vmem>>, vector<16x32xf32>
      tpu.vector_store %arg15[%c0_31, %c0_32], %26 {strides = array<i32>} : memref<16x32xf32, #tpu.memory_space<vmem>>, vector<16x32xf32>,
    } else {
    }
    %c0 = arith.constant 0 : index
    %c0_1 = arith.constant 0 : index
    %3 = vector.load %arg3[%c0, %c0_1] : memref<16x32xbf16, #tpu.memory_space<vmem>>, vector<16x32xbf16>
    %c0_2 = arith.constant 0 : index
    %c0_3 = arith.constant 0 : index
    %4 = vector.load %arg13[%c0_2, %c0_3] : memref<16x32xf32, #tpu.memory_space<vmem>>, vector<16x32xf32>
    %c0_4 = arith.constant 0 : index
    %c0_5 = arith.constant 0 : index
    %5 = vector.load %arg4[%c0_4, %c0_5] : memref<32x32xbf16, #tpu.memory_space<vmem>>, vector<32x32xbf16>
    %cst = arith.constant dense<0.000000e+00> : vector<16x32xf32>
    %6 = tpu.matmul %3, %5, %cst {dimension_numbers = #tpu.dot_dimension_numbers<[1], [0], [0], [1], [0, 0, 1, 1], [], []>} : vector<16x32xbf16>, vector<32x32xbf16>, vector<16x32xf32> -> vector<16x32xf32>
    %7 = arith.addf %4, %6 : vector<16x32xf32>
    %c0_6 = arith.constant 0 : index
    %c0_7 = arith.constant 0 : index
    %8 = vector.load %arg13[%c0_6, %c0_7] : memref<16x32xf32, #tpu.memory_space<vmem>>, vector<16x32xf32>
    tpu.vector_store %arg13[%c0_6, %c0_7], %7 {strides = array<i32>} : memref<16x32xf32, #tpu.memory_space<vmem>>, vector<16x32xf32>,
    %c0_8 = arith.constant 0 : index
    %c0_9 = arith.constant 0 : index
    %9 = vector.load %arg14[%c0_8, %c0_9] : memref<16x32xf32, #tpu.memory_space<vmem>>, vector<16x32xf32>
    %c0_10 = arith.constant 0 : index
    %c0_11 = arith.constant 0 : index
    %10 = vector.load %arg5[%c0_10, %c0_11] : memref<32x32xbf16, #tpu.memory_space<vmem>>, vector<32x32xbf16>
    %cst_12 = arith.constant dense<0.000000e+00> : vector<16x32xf32>
    %11 = tpu.matmul %3, %10, %cst_12 {dimension_numbers = #tpu.dot_dimension_numbers<[1], [0], [0], [1], [0, 0, 1, 1], [], []>} : vector<16x32xbf16>, vector<32x32xbf16>, vector<16x32xf32> -> vector<16x32xf32>
    %12 = arith.addf %9, %11 : vector<16x32xf32>
    %c0_13 = arith.constant 0 : index
    %c0_14 = arith.constant 0 : index
    %13 = vector.load %arg14[%c0_13, %c0_14] : memref<16x32xf32, #tpu.memory_space<vmem>>, vector<16x32xf32>
    tpu.vector_store %arg14[%c0_13, %c0_14], %12 {strides = array<i32>} : memref<16x32xf32, #tpu.memory_space<vmem>>, vector<16x32xf32>,
    %c0_15 = arith.constant 0 : index
    %c0_16 = arith.constant 0 : index
    %14 = vector.load %arg15[%c0_15, %c0_16] : memref<16x32xf32, #tpu.memory_space<vmem>>, vector<16x32xf32>
    %c0_17 = arith.constant 0 : index
    %c0_18 = arith.constant 0 : index
    %15 = vector.load %arg6[%c0_17, %c0_18] : memref<32x32xbf16, #tpu.memory_space<vmem>>, vector<32x32xbf16>
    %cst_19 = arith.constant dense<0.000000e+00> : vector<16x32xf32>
    %16 = tpu.matmul %3, %15, %cst_19 {dimension_numbers = #tpu.dot_dimension_numbers<[1], [0], [0], [1], [0, 0, 1, 1], [], []>} : vector<16x32xbf16>, vector<32x32xbf16>, vector<16x32xf32> -> vector<16x32xf32>
    %17 = arith.addf %14, %16 : vector<16x32xf32>
    %c0_20 = arith.constant 0 : index
    %c0_21 = arith.constant 0 : index
    %18 = vector.load %arg15[%c0_20, %c0_21] : memref<16x32xf32, #tpu.memory_space<vmem>>, vector<16x32xf32>
    tpu.vector_store %arg15[%c0_20, %c0_21], %17 {strides = array<i32>} : memref<16x32xf32, #tpu.memory_space<vmem>>, vector<16x32xf32>,
    %c0_i32_22 = arith.constant 0 : i32
    %19 = arith.cmpi eq, %arg2, %c0_i32_22 : i32
    %20 = arith.extui %19 : i1 to i32
    %c0_i32_23 = arith.constant 0 : i32
    %21 = arith.cmpi ne, %20, %c0_i32_23 : i32
    scf.if %21 {
      %c0_24 = arith.constant 0 : index
      %c0_25 = arith.constant 0 : index
      %22 = vector.load %arg13[%c0_24, %c0_25] : memref<16x32xf32, #tpu.memory_space<vmem>>, vector<16x32xf32>
      %c0_26 = arith.constant 0 : index
      %c0_27 = arith.constant 0 : index
      %23 = vector.load %arg7[%c0_26, %c0_27] : memref<1x32xf32, #tpu.memory_space<vmem>>, vector<1x32xf32>
      %24 = vector.broadcast %23 : vector<1x32xf32> to vector<16x32xf32>
      %25 = arith.addf %22, %24 : vector<16x32xf32>
      %26 = arith.truncf %25 : vector<16x32xf32> to vector<16x32xbf16>
      %c0_28 = arith.constant 0 : index
      %c0_29 = arith.constant 0 : index
      %27 = vector.load %arg10[%c0_28, %c0_29] : memref<16x32xbf16, #tpu.memory_space<vmem>>, vector<16x32xbf16>
      tpu.vector_store %arg10[%c0_28, %c0_29], %26 {strides = array<i32>} : memref<16x32xbf16, #tpu.memory_space<vmem>>, vector<16x32xbf16>,
      %c0_30 = arith.constant 0 : index
      %c0_31 = arith.constant 0 : index
      %28 = vector.load %arg14[%c0_30, %c0_31] : memref<16x32xf32, #tpu.memory_space<vmem>>, vector<16x32xf32>
      %c0_32 = arith.constant 0 : index
      %c0_33 = arith.constant 0 : index
      %29 = vector.load %arg8[%c0_32, %c0_33] : memref<1x32xf32, #tpu.memory_space<vmem>>, vector<1x32xf32>
      %30 = vector.broadcast %29 : vector<1x32xf32> to vector<16x32xf32>
      %31 = arith.addf %28, %30 : vector<16x32xf32>
      %32 = arith.truncf %31 : vector<16x32xf32> to vector<16x32xbf16>
      %c0_34 = arith.constant 0 : index
      %c0_35 = arith.constant 0 : index
      %33 = vector.load %arg11[%c0_34, %c0_35] : memref<16x32xbf16, #tpu.memory_space<vmem>>, vector<16x32xbf16>
      tpu.vector_store %arg11[%c0_34, %c0_35], %32 {strides = array<i32>} : memref<16x32xbf16, #tpu.memory_space<vmem>>, vector<16x32xbf16>,
      %c0_36 = arith.constant 0 : index
      %c0_37 = arith.constant 0 : index
      %34 = vector.load %arg15[%c0_36, %c0_37] : memref<16x32xf32, #tpu.memory_space<vmem>>, vector<16x32xf32>
      %c0_38 = arith.constant 0 : index
      %c0_39 = arith.constant 0 : index
      %35 = vector.load %arg9[%c0_38, %c0_39] : memref<1x32xf32, #tpu.memory_space<vmem>>, vector<1x32xf32>
      %36 = vector.broadcast %35 : vector<1x32xf32> to vector<16x32xf32>
      %37 = arith.addf %34, %36 : vector<16x32xf32>
      %38 = arith.truncf %37 : vector<16x32xf32> to vector<16x32xbf16>
      %c0_40 = arith.constant 0 : index
      %c0_41 = arith.constant 0 : index
      %39 = vector.load %arg12[%c0_40, %c0_41] : memref<16x32xbf16, #tpu.memory_space<vmem>>, vector<16x32xbf16>
      tpu.vector_store %arg12[%c0_40, %c0_41], %38 {strides = array<i32>} : memref<16x32xbf16, #tpu.memory_space<vmem>>, vector<16x32xbf16>,
    } else {
    }
    return
  }
  func.func @transform_0(%arg0: i32, %arg1: i32, %arg2: i32) -> (i32, i32) {
    %c0_i32 = arith.constant 0 : i32
    return %arg0, %arg2 : i32, i32
  }
  func.func @transform_1(%arg0: i32, %arg1: i32, %arg2: i32) -> (i32, i32) {
    %c0_i32 = arith.constant 0 : i32
    return %arg2, %arg1 : i32, i32
  }
  func.func @transform_2(%arg0: i32, %arg1: i32, %arg2: i32) -> (i32, i32) {
    %c0_i32 = arith.constant 0 : i32
    return %arg2, %arg1 : i32, i32
  }
  func.func @transform_3(%arg0: i32, %arg1: i32, %arg2: i32) -> (i32, i32) {
    %c0_i32 = arith.constant 0 : i32
    return %arg2, %arg1 : i32, i32
  }
  func.func @transform_4(%arg0: i32, %arg1: i32, %arg2: i32) -> (i32, i32) {
    %c0_i32 = arith.constant 0 : i32
    %c0_i32_0 = arith.constant 0 : i32
    return %c0_i32, %arg1 : i32, i32
  }
  func.func @transform_5(%arg0: i32, %arg1: i32, %arg2: i32) -> (i32, i32) {
    %c0_i32 = arith.constant 0 : i32
    %c0_i32_0 = arith.constant 0 : i32
    return %c0_i32, %arg1 : i32, i32
  }
  func.func @transform_6(%arg0: i32, %arg1: i32, %arg2: i32) -> (i32, i32) {
    %c0_i32 = arith.constant 0 : i32
    %c0_i32_0 = arith.constant 0 : i32
    return %c0_i32, %arg1 : i32, i32
  }
  func.func @transform_7(%arg0: i32, %arg1: i32, %arg2: i32) -> (i32, i32) {
    %c0_i32 = arith.constant 0 : i32
    return %arg0, %arg1 : i32, i32
  }
  func.func @transform_8(%arg0: i32, %arg1: i32, %arg2: i32) -> (i32, i32) {
    %c0_i32 = arith.constant 0 : i32
    return %arg0, %arg1 : i32, i32
  }
  func.func @transform_9(%arg0: i32, %arg1: i32, %arg2: i32) -> (i32, i32) {
    %c0_i32 = arith.constant 0 : i32
    return %arg0, %arg1 : i32, i32
  }
}

</mosaic_0001>

<llo_original>
// kernel: tpu_custom_call.1
$region0: #{tpu_custom_call.1}
  #allocation0 [shape = 'u32[]', space=smem, size = 0x4, offset = 0x4, fixed_abs, tag = 'smem constant byte address 0x4 - core index']
  #allocation1 [shape = 'u32[144,128]{1,0:T(1,128)}', space=vmem, size = 0x12000, scoped, tag = 'internal scratch']
  #allocation2 [shape = 'f32[16,32]{1,0:T(8,128)}', space=vmem, size = 0x2000, scoped, tag = 'scratch operand']
  #allocation3 [shape = 'f32[16,32]{1,0:T(8,128)}', space=vmem, size = 0x2000, scoped, tag = 'scratch operand']
  #allocation4 [shape = 'f32[16,32]{1,0:T(8,128)}', space=vmem, size = 0x2000, scoped, tag = 'scratch operand']
  %s0 = inlined_call_operand.hbm [shape: bf16[16,32], index: 0, kind: input, shape index: {}]
  %s1 = inlined_call_operand.hbm [shape: bf16[32,32], index: 1, kind: input, shape index: {}]
  %s2 = inlined_call_operand.hbm [shape: bf16[32,32], index: 2, kind: input, shape index: {}]
  %s3 = inlined_call_operand.hbm [shape: bf16[32,32], index: 3, kind: input, shape index: {}]
  %s4 = inlined_call_operand.vmem [shape: f32[1,32], index: 4, kind: input, shape index: {}]
  %s5 = inlined_call_operand.vmem [shape: f32[1,32], index: 5, kind: input, shape index: {}]
  %s6 = inlined_call_operand.vmem [shape: f32[1,32], index: 6, kind: input, shape index: {}]
  %s7 = inlined_call_operand.hbm [shape: bf16[16,32], index: 7, kind: output, shape index: {0}]
  %s8 = inlined_call_operand.hbm [shape: bf16[16,32], index: 8, kind: output, shape index: {1}]
  %s9 = inlined_call_operand.hbm [shape: bf16[16,32], index: 9, kind: output, shape index: {2}]
  %10 = xla_tuple %s7, %s8, %s9
  %s11 = sld [smem:[#allocation0]]
  $region78: #{tpu_custom_call.1} parent=0
    _
  %s13 = ssub.s32 1, %s11
  %s14 = scalar_select 0, %s13, %s11
  $region1: #{tpu_custom_call.1} parent=0
    #allocation5 [shape = 'u8[4096]{0}', space=vmem, size = 0x1000, scoped, tag = 'input window, operand 0, single buffered']
    #allocation6 [shape = 's32[1]{0}', space=sflag, size = 0x4, scoped, tag = 'scoped memory for tpu_custom_call.1']
    #allocation7 [shape = 's32[1]{0}', space=sflag, size = 0x4, scoped, tag = 'scoped memory for tpu_custom_call.1']
    #allocation8 [shape = 'u8[8192]{0}', space=vmem, size = 0x2000, scoped, tag = 'input window, operand 1, single buffered']
    #allocation9 [shape = 's32[1]{0}', space=sflag, size = 0x4, scoped, tag = 'scoped memory for tpu_custom_call.1']
    #allocation10 [shape = 'u8[8192]{0}', space=vmem, size = 0x2000, scoped, tag = 'input window, operand 2, single buffered']
    #allocation11 [shape = 'u8[8192]{0}', space=vmem, size = 0x2000, scoped, tag = 'input window, operand 3, single buffered']
    #allocation12 [shape = 's32[1]{0}', space=sflag, size = 0x4, scoped, tag = 'scoped memory for tpu_custom_call.1']
    #allocation13 [shape = 'u8[4096]{0}', space=vmem, size = 0x1000, scoped, tag = 'output window, operand 0, single buffered']
    #allocation14 [shape = 'u8[4096]{0}', space=vmem, size = 0x1000, scoped, tag = 'output window, operand 1, single buffered']
    #allocation15 [shape = 's32[1]{0}', space=sflag, size = 0x4, scoped, tag = 'scoped memory for tpu_custom_call.1']
    #allocation16 [shape = 'u8[4096]{0}', space=vmem, size = 0x1000, scoped, tag = 'output window, operand 2, single buffered']
    %15 = vsyncpa [#allocation6], 0
    %16 = vsyncpa [#allocation9], 0
    %17 = vsyncpa [#allocation12], 0
    %18 = vsyncpa [#allocation7], 0
    %19 = vsyncpa [#allocation15], 0
    // Predicated region
    $region2: #{tpu_custom_call.1} parent=1 // pred_check
      _
    $region3: #{tpu_custom_call.1} parent=1 // pred_check_branch
      %21 = sbr.rel (0) target = $region5
    $region4: #{tpu_custom_call.1} parent=1 // pred_region
      %s23 = ssub.s32 128, 128
      %24 = vsyncadd [#allocation6], %s23
      %s25 = sshll.u32 [#allocation5], 4
      %s26 = int_to_ptr.vmem [resolvable:$true] %s25
      %31 = dma.hbm_to_vmem [thread:$0]  %s0, 128, %s26, [#allocation6], 64, 64, 4
    $region5: #{tpu_custom_call.1} parent=1 // pred_fallthru
      _
    // Predicated region
    $region6: #{tpu_custom_call.1} parent=1 // pred_check
      _
    $region7: #{tpu_custom_call.1} parent=1 // pred_check_branch
      %33 = sbr.rel (0) target = $region9
    $region8: #{tpu_custom_call.1} parent=1 // pred_region
      %s35 = ssub.s32 256, 256
      %36 = vsyncadd [#allocation9], %s35
      %s37 = sshll.u32 [#allocation8], 4
      %s38 = int_to_ptr.vmem [resolvable:$true] %s37
      %43 = dma.hbm_to_vmem [thread:$0]  %s1, 256, %s38, [#allocation9], 64, 64, 4
    $region9: #{tpu_custom_call.1} parent=1 // pred_fallthru
      _
    // Predicated region
    $region10: #{tpu_custom_call.1} parent=1 // pred_check
      _
    $region11: #{tpu_custom_call.1} parent=1 // pred_check_branch
      %45 = sbr.rel (0) target = $region13
    $region12: #{tpu_custom_call.1} parent=1 // pred_region
      %s47 = ssub.s32 256, 256
      %48 = vsyncadd [#allocation9], %s47
      %s49 = sshll.u32 [#allocation10], 4
      %s50 = int_to_ptr.vmem [resolvable:$true] %s49
      %55 = dma.hbm_to_vmem [thread:$0]  %s2, 256, %s50, [#allocation9], 64, 64, 4
    $region13: #{tpu_custom_call.1} parent=1 // pred_fallthru
      _
    // Predicated region
    $region14: #{tpu_custom_call.1} parent=1 // pred_check
      _
    $region15: #{tpu_custom_call.1} parent=1 // pred_check_branch
      %57 = sbr.rel (0) target = $region17
    $region16: #{tpu_custom_call.1} parent=1 // pred_region
      %s59 = ssub.s32 256, 256
      %60 = vsyncadd [#allocation12], %s59
      %s61 = sshll.u32 [#allocation11], 4
      %s62 = int_to_ptr.vmem [resolvable:$true] %s61
      %67 = dma.hbm_to_vmem [thread:$0]  %s3, 256, %s62, [#allocation12], 64, 64, 4
    $region17: #{tpu_custom_call.1} parent=1 // pred_fallthru
      _
    // Predicated region
    $region18: #{tpu_custom_call.1} parent=1 // pred_check
      _
    $region19: #{tpu_custom_call.1} parent=1 // pred_check_branch
      %69 = sbr.rel (0) target = $region21
    $region20: #{tpu_custom_call.1} parent=1 // pred_region
      _
    $region21: #{tpu_custom_call.1} parent=1 // pred_fallthru
      _
    // Predicated region
    $region22: #{tpu_custom_call.1} parent=1 // pred_check
      _
    $region23: #{tpu_custom_call.1} parent=1 // pred_check_branch
      %71 = sbr.rel (0) target = $region25
    $region24: #{tpu_custom_call.1} parent=1 // pred_region
      _
    $region25: #{tpu_custom_call.1} parent=1 // pred_fallthru
      _
    // Predicated region
    $region26: #{tpu_custom_call.1} parent=1 // pred_check
      _
    $region27: #{tpu_custom_call.1} parent=1 // pred_check_branch
      %73 = sbr.rel (0) target = $region29
    $region28: #{tpu_custom_call.1} parent=1 // pred_region
      _
    $region29: #{tpu_custom_call.1} parent=1 // pred_fallthru
      _
    // Predicated region
    $region30: #{tpu_custom_call.1} parent=1 // pred_check
      _
    $region31: #{tpu_custom_call.1} parent=1 // pred_check_branch
      %75 = sbr.rel (0) target = $region33
    $region32: #{tpu_custom_call.1} parent=1 // pred_region
      %76 = dma.done [#allocation6], 128
    $region33: #{tpu_custom_call.1} parent=1 // pred_fallthru
      _
    // Predicated region
    $region34: #{tpu_custom_call.1} parent=1 // pred_check
      _
    $region35: #{tpu_custom_call.1} parent=1 // pred_check_branch
      %78 = sbr.rel (0) target = $region37
    $region36: #{tpu_custom_call.1} parent=1 // pred_region
      %79 = dma.done [#allocation9], 256
    $region37: #{tpu_custom_call.1} parent=1 // pred_fallthru
      _
    // Predicated region
    $region38: #{tpu_custom_call.1} parent=1 // pred_check
      _
    $region39: #{tpu_custom_call.1} parent=1 // pred_check_branch
      %81 = sbr.rel (0) target = $region41
    $region40: #{tpu_custom_call.1} parent=1 // pred_region
      %82 = dma.done [#allocation9], 256
    $region41: #{tpu_custom_call.1} parent=1 // pred_fallthru
      _
    // Predicated region
    $region42: #{tpu_custom_call.1} parent=1 // pred_check
      _
    $region43: #{tpu_custom_call.1} parent=1 // pred_check_branch
      %84 = sbr.rel (0) target = $region45
    $region44: #{tpu_custom_call.1} parent=1 // pred_region
      %85 = dma.done [#allocation12], 256
    $region45: #{tpu_custom_call.1} parent=1 // pred_fallthru
      _
    %p87 = scmp.eq.s32.totalorder 0, 0
    // Predicated region
    $region46: #{tpu_custom_call.1} parent=1 // pred_check
      %p88 = pneg %p87
    $region47: #{tpu_custom_call.1} parent=1 // pred_check_branch
      %90 = sbr.rel (%p88) target = $region49
    $region48: #{tpu_custom_call.1} parent=1 // pred_region
      %vm91 = vcmask 261120
      %92 = vst.msk [vmem:[#allocation2] sm:$0xff] %vm91, 0.0
      %93 = vst.msk [vmem:[#allocation2 + $0x8] sm:$0xff] %vm91, 0.0
      %94 = vst.msk [vmem:[#allocation3] sm:$0xff] %vm91, 0.0
      %95 = vst.msk [vmem:[#allocation3 + $0x8] sm:$0xff] %vm91, 0.0
      %96 = vst.msk [vmem:[#allocation4] sm:$0xff] %vm91, 0.0
      %97 = vst.msk [vmem:[#allocation4 + $0x8] sm:$0xff] %vm91, 0.0
    $region49: #{tpu_custom_call.1} parent=1 // pred_fallthru
      _
    %v98 = vld [vmem:[#allocation5] sm:$0xf]
    %v99 = vld [vmem:[#allocation5 + $0x4] sm:$0xf]
    %v100 = vld [vmem:[#allocation2] sm:$0xff]
    %v101 = vld [vmem:[#allocation2 + $0x8] sm:$0xff]
    %v102 = vld [vmem:[#allocation8] sm:$0xf]
    %v103 = vld [vmem:[#allocation8 + $0x4] sm:$0xf]
    %v104 = vld [vmem:[#allocation8 + $0x8] sm:$0xf]
    %v105 = vld [vmem:[#allocation8 + $0xc] sm:$0xf]
    %v108 = vunpack.c.l.b16 %v98
    %v109 = vunpack.c.l.b16 %v99
    %v110 = vpack.c.b16 %v109, %v108
    %v115 = vunpack.c.l.b16 %v102
    %v116 = vunpack.c.l.b16 %v103
    %v117 = vunpack.c.l.b16 %v104
    %v118 = vunpack.c.l.b16 %v105
    %v119 = vpack.c.b16 %v116, %v115
    %v120 = vpack.c.b16 %v118, %v117
    %vm123 = vcmask 261120
    %v125 = vsel %vm123, %v110, 0
    %127 = vmatprep.subr.bf16.mxu0 0
    %128 = vmatpush1.bf16.msra.mxu0 0
    %129 = vmatprep.subr.bf16.mxu0 0
    %130 = vmatpush1.bf16.msra.mxu0 0
    %131 = vmatprep.subr.bf16.mxu0 0
    %132 = vmatpush1.bf16.msra.mxu0 0
    %133 = vmatprep.subr.bf16.mxu0 0
    %134 = vmatpush1.bf16.msra.mxu0 0
    %135 = vmatprep.subr.bf16.mxu0 0
    %136 = vmatpush1.bf16.msra.mxu0 0
    %137 = vmatprep.subr.bf16.mxu0 0
    %138 = vmatpush1.bf16.msra.mxu0 0
    %139 = vmatprep.subr.bf16.mxu0 0
    %140 = vmatpush1.bf16.msra.mxu0 %v120
    %141 = vmatprep.subr.bf16.mxu0 0
    %142 = vmatpush1.bf16.msra.mxu0 %v119
    %143 = vmatprep.subr.bf16.mxu0 0
    %144 = vmatpush2.bf16.msra.mxu0 0
    %145 = vmatprep.subr.bf16.mxu0 0
    %146 = vmatpush2.bf16.msra.mxu0 0
    %147 = vmatprep.subr.bf16.mxu0 0
    %148 = vmatpush2.bf16.msra.mxu0 0
    %149 = vmatprep.subr.bf16.mxu0 0
    %150 = vmatpush2.bf16.msra.mxu0 0
    %151 = vmatprep.subr.bf16.mxu0 0
    %152 = vmatpush2.bf16.msra.mxu0 0
    %153 = vmatprep.subr.bf16.mxu0 0
    %154 = vmatpush2.bf16.msra.mxu0 0
    %155 = vmatprep.subr.bf16.mxu0 0
    %156 = vmatpush2.bf16.msra.mxu0 0
    %157 = vmatprep.subr.bf16.mxu0 0
    %158 = vmatpush2.bf16.msra.mxu0 0
    %159 = vmatprep.mubr.bf16.mxu0 0
    %160 = vmatmul.mubr.bf16.gmra.mxu0 %v125
    %v161 = vpop.f32.mrf.mxu0
    %v162 = vadd.f32 0.0, %v161
    %v163 = vpop.f32.mrf.mxu0
    %v164 = vpop.f32.mrf.mxu0
    %v165 = vadd.f32 0.0, %v164
    %v166 = vpop.f32.mrf.mxu0
    %167 = vdwg.mxu0
    %v168 = vadd.f32 %v100, %v162
    %v169 = vadd.f32 %v101, %v165
    %170 = vst.msk [vmem:[#allocation2] sm:$0xff] %vm123, %v168
    %171 = vst.msk [vmem:[#allocation2 + $0x8] sm:$0xff] %vm123, %v169
    %v172 = vld [vmem:[#allocation3] sm:$0xff]
    %v173 = vld [vmem:[#allocation3 + $0x8] sm:$0xff]
    %v174 = vld [vmem:[#allocation10] sm:$0xf]
    %v175 = vld [vmem:[#allocation10 + $0x4] sm:$0xf]
    %v176 = vld [vmem:[#allocation10 + $0x8] sm:$0xf]
    %v177 = vld [vmem:[#allocation10 + $0xc] sm:$0xf]
    %v182 = vunpack.c.l.b16 %v174
    %v183 = vunpack.c.l.b16 %v175
    %v184 = vunpack.c.l.b16 %v176
    %v185 = vunpack.c.l.b16 %v177
    %v186 = vpack.c.b16 %v183, %v182
    %v187 = vpack.c.b16 %v185, %v184
    %190 = vmatprep.subr.bf16.mxu0 0
    %191 = vmatpush1.bf16.msra.mxu0 0
    %192 = vmatprep.subr.bf16.mxu0 0
    %193 = vmatpush1.bf16.msra.mxu0 0
    %194 = vmatprep.subr.bf16.mxu0 0
    %195 = vmatpush1.bf16.msra.mxu0 0
    %196 = vmatprep.subr.bf16.mxu0 0
    %197 = vmatpush1.bf16.msra.mxu0 0
    %198 = vmatprep.subr.bf16.mxu0 0
    %199 = vmatpush1.bf16.msra.mxu0 0
    %200 = vmatprep.subr.bf16.mxu0 0
    %201 = vmatpush1.bf16.msra.mxu0 0
    %202 = vmatprep.subr.bf16.mxu0 0
    %203 = vmatpush1.bf16.msra.mxu0 %v187
    %204 = vmatprep.subr.bf16.mxu0 0
    %205 = vmatpush1.bf16.msra.mxu0 %v186
    %206 = vmatprep.subr.bf16.mxu0 0
    %207 = vmatpush2.bf16.msra.mxu0 0
    %208 = vmatprep.subr.bf16.mxu0 0
    %209 = vmatpush2.bf16.msra.mxu0 0
    %210 = vmatprep.subr.bf16.mxu0 0
    %211 = vmatpush2.bf16.msra.mxu0 0
    %212 = vmatprep.subr.bf16.mxu0 0
    %213 = vmatpush2.bf16.msra.mxu0 0
    %214 = vmatprep.subr.bf16.mxu0 0
    %215 = vmatpush2.bf16.msra.mxu0 0
    %216 = vmatprep.subr.bf16.mxu0 0
    %217 = vmatpush2.bf16.msra.mxu0 0
    %218 = vmatprep.subr.bf16.mxu0 0
    %219 = vmatpush2.bf16.msra.mxu0 0
    %220 = vmatprep.subr.bf16.mxu0 0
    %221 = vmatpush2.bf16.msra.mxu0 0
    %222 = vmatprep.mubr.bf16.mxu0 0
    %223 = vmatmul.mubr.bf16.gmra.mxu0 %v125
    %v224 = vpop.f32.mrf.mxu0
    %v225 = vadd.f32 0.0, %v224
    %v226 = vpop.f32.mrf.mxu0
    %v227 = vpop.f32.mrf.mxu0
    %v228 = vadd.f32 0.0, %v227
    %v229 = vpop.f32.mrf.mxu0
    %230 = vdwg.mxu0
    %v231 = vadd.f32 %v172, %v225
    %v232 = vadd.f32 %v173, %v228
    %233 = vst.msk [vmem:[#allocation3] sm:$0xff] %vm123, %v231
    %234 = vst.msk [vmem:[#allocation3 + $0x8] sm:$0xff] %vm123, %v232
    %v235 = vld [vmem:[#allocation4] sm:$0xff]
    %v236 = vld [vmem:[#allocation4 + $0x8] sm:$0xff]
    %v237 = vld [vmem:[#allocation11] sm:$0xf]
    %v238 = vld [vmem:[#allocation11 + $0x4] sm:$0xf]
    %v239 = vld [vmem:[#allocation11 + $0x8] sm:$0xf]
    %v240 = vld [vmem:[#allocation11 + $0xc] sm:$0xf]
    %v245 = vunpack.c.l.b16 %v237
    %v246 = vunpack.c.l.b16 %v238
    %v247 = vunpack.c.l.b16 %v239
    %v248 = vunpack.c.l.b16 %v240
    %v249 = vpack.c.b16 %v246, %v245
    %v250 = vpack.c.b16 %v248, %v247
    %253 = vmatprep.subr.bf16.mxu0 0
    %254 = vmatpush1.bf16.msra.mxu0 0
    %255 = vmatprep.subr.bf16.mxu0 0
    %256 = vmatpush1.bf16.msra.mxu0 0
    %257 = vmatprep.subr.bf16.mxu0 0
    %258 = vmatpush1.bf16.msra.mxu0 0
    %259 = vmatprep.subr.bf16.mxu0 0
    %260 = vmatpush1.bf16.msra.mxu0 0
    %261 = vmatprep.subr.bf16.mxu0 0
    %262 = vmatpush1.bf16.msra.mxu0 0
    %263 = vmatprep.subr.bf16.mxu0 0
    %264 = vmatpush1.bf16.msra.mxu0 0
    %265 = vmatprep.subr.bf16.mxu0 0
    %266 = vmatpush1.bf16.msra.mxu0 %v250
    %267 = vmatprep.subr.bf16.mxu0 0
    %268 = vmatpush1.bf16.msra.mxu0 %v249
    %269 = vmatprep.subr.bf16.mxu0 0
    %270 = vmatpush2.bf16.msra.mxu0 0
    %271 = vmatprep.subr.bf16.mxu0 0
    %272 = vmatpush2.bf16.msra.mxu0 0
    %273 = vmatprep.subr.bf16.mxu0 0
    %274 = vmatpush2.bf16.msra.mxu0 0
    %275 = vmatprep.subr.bf16.mxu0 0
    %276 = vmatpush2.bf16.msra.mxu0 0
    %277 = vmatprep.subr.bf16.mxu0 0
    %278 = vmatpush2.bf16.msra.mxu0 0
    %279 = vmatprep.subr.bf16.mxu0 0
    %280 = vmatpush2.bf16.msra.mxu0 0
    %281 = vmatprep.subr.bf16.mxu0 0
    %282 = vmatpush2.bf16.msra.mxu0 0
    %283 = vmatprep.subr.bf16.mxu0 0
    %284 = vmatpush2.bf16.msra.mxu0 0
    %285 = vmatprep.mubr.bf16.mxu0 0
    %286 = vmatmul.mubr.bf16.gmra.mxu0 %v125
    %v287 = vpop.f32.mrf.mxu0
    %v288 = vadd.f32 0.0, %v287
    %v289 = vpop.f32.mrf.mxu0
    %v290 = vpop.f32.mrf.mxu0
    %v291 = vadd.f32 0.0, %v290
    %v292 = vpop.f32.mrf.mxu0
    %293 = vdwg.mxu0
    %v294 = vadd.f32 %v235, %v288
    %v295 = vadd.f32 %v236, %v291
    %296 = vst.msk [vmem:[#allocation4] sm:$0xff] %vm123, %v294
    %297 = vst.msk [vmem:[#allocation4 + $0x8] sm:$0xff] %vm123, %v295
    // Predicated region
    $region50: #{tpu_custom_call.1} parent=1 // pred_check
      %p298 = pneg %p87
    $region51: #{tpu_custom_call.1} parent=1 // pred_check_branch
      %300 = sbr.rel (%p298) target = $region53
    $region52: #{tpu_custom_call.1} parent=1 // pred_region
      %v301 = vld [vmem:[#allocation2] sm:$0xff]
      %v302 = vld [vmem:[#allocation2 + $0x8] sm:$0xff]
      %v303 = vld [vmem:[%s4] sm:$0x1]
      %v305 = vlaneseq
      %v306 = vshrl.u32 %v305, 7
      %v307 = vsub.s32 0, %v306
      %v308 = vrot.slane %v303, %v307
      %v310 = vadd.f32 %v301, %v308
      %v311 = vadd.f32 %v302, %v308
      %v312 = vpack.c.bf16 %v311, %v310
      %v314 = vunpack.c.l.b16 %v312
      %v315 = vunpack.c.h.b16 %v312
      %v316 = vpack.c.b16 %v314, %v314
      %v317 = vpack.c.b16 %v315, %v315
      %vm320 = vcmask 257024
      %321 = vst.msk [vmem:[#allocation13] sm:$0xf] %vm320, %v316
      %322 = vst.msk [vmem:[#allocation13 + $0x4] sm:$0xf] %vm320, %v317
      %v323 = vld [vmem:[#allocation3] sm:$0xff]
      %v324 = vld [vmem:[#allocation3 + $0x8] sm:$0xff]
      %v325 = vld [vmem:[%s5] sm:$0x1]
      %v327 = vlaneseq
      %v328 = vshrl.u32 %v327, 7
      %v329 = vsub.s32 0, %v328
      %v330 = vrot.slane %v325, %v329
      %v332 = vadd.f32 %v323, %v330
      %v333 = vadd.f32 %v324, %v330
      %v334 = vpack.c.bf16 %v333, %v332
      %v336 = vunpack.c.l.b16 %v334
      %v337 = vunpack.c.h.b16 %v334
      %v338 = vpack.c.b16 %v336, %v336
      %v339 = vpack.c.b16 %v337, %v337
      %342 = vst.msk [vmem:[#allocation14] sm:$0xf] %vm320, %v338
      %343 = vst.msk [vmem:[#allocation14 + $0x4] sm:$0xf] %vm320, %v339
      %v344 = vld [vmem:[#allocation4] sm:$0xff]
      %v345 = vld [vmem:[#allocation4 + $0x8] sm:$0xff]
      %v346 = vld [vmem:[%s6] sm:$0x1]
      %v348 = vlaneseq
      %v349 = vshrl.u32 %v348, 7
      %v350 = vsub.s32 0, %v349
      %v351 = vrot.slane %v346, %v350
      %v353 = vadd.f32 %v344, %v351
      %v354 = vadd.f32 %v345, %v351
      %v355 = vpack.c.bf16 %v354, %v353
      %v357 = vunpack.c.l.b16 %v355
      %v358 = vunpack.c.h.b16 %v355
      %v359 = vpack.c.b16 %v357, %v357
      %v360 = vpack.c.b16 %v358, %v358
      %363 = vst.msk [vmem:[#allocation16] sm:$0xf] %vm320, %v359
      %364 = vst.msk [vmem:[#allocation16 + $0x4] sm:$0xf] %vm320, %v360
    $region53: #{tpu_custom_call.1} parent=1 // pred_fallthru
      _
    // Predicated region
    $region54: #{tpu_custom_call.1} parent=1 // pred_check
      _
    $region55: #{tpu_custom_call.1} parent=1 // pred_check_branch
      %366 = sbr.rel (0) target = $region57
    $region56: #{tpu_custom_call.1} parent=1 // pred_region
      %s368 = ssub.s32 128, 128
      %369 = vsyncadd [#allocation7], %s368
      %s370 = sshll.u32 [#allocation13], 4
      %s371 = int_to_ptr.vmem [resolvable:$true] %s370
      %376 = dma.vmem_to_hbm [thread:$0]  %s371, 128, %s7, [#allocation7], 64, 64, 4
    $region57: #{tpu_custom_call.1} parent=1 // pred_fallthru
      _
    // Predicated region
    $region58: #{tpu_custom_call.1} parent=1 // pred_check
      _
    $region59: #{tpu_custom_call.1} parent=1 // pred_check_branch
      %378 = sbr.rel (0) target = $region61
    $region60: #{tpu_custom_call.1} parent=1 // pred_region
      %s380 = ssub.s32 128, 128
      %381 = vsyncadd [#allocation15], %s380
      %s382 = sshll.u32 [#allocation14], 4
      %s383 = int_to_ptr.vmem [resolvable:$true] %s382
      %388 = dma.vmem_to_hbm [thread:$0]  %s383, 128, %s8, [#allocation15], 64, 64, 4
    $region61: #{tpu_custom_call.1} parent=1 // pred_fallthru
      _
    // Predicated region
    $region62: #{tpu_custom_call.1} parent=1 // pred_check
      _
    $region63: #{tpu_custom_call.1} parent=1 // pred_check_branch
      %390 = sbr.rel (0) target = $region65
    $region64: #{tpu_custom_call.1} parent=1 // pred_region
      %s392 = ssub.s32 128, 128
      %393 = vsyncadd [#allocation15], %s392
      %s394 = sshll.u32 [#allocation16], 4
      %s395 = int_to_ptr.vmem [resolvable:$true] %s394
      %400 = dma.vmem_to_hbm [thread:$0]  %s395, 128, %s9, [#allocation15], 64, 64, 4
    $region65: #{tpu_custom_call.1} parent=1 // pred_fallthru
      _
    // Predicated region
    $region66: #{tpu_custom_call.1} parent=1 // pred_check
      _
    $region67: #{tpu_custom_call.1} parent=1 // pred_check_branch
      %402 = sbr.rel (0) target = $region69
    $region68: #{tpu_custom_call.1} parent=1 // pred_region
      %403 = dma.done [#allocation7], 128
    $region69: #{tpu_custom_call.1} parent=1 // pred_fallthru
      _
    // Predicated region
    $region70: #{tpu_custom_call.1} parent=1 // pred_check
      _
    $region71: #{tpu_custom_call.1} parent=1 // pred_check_branch
      %405 = sbr.rel (0) target = $region73
    $region72: #{tpu_custom_call.1} parent=1 // pred_region
      %406 = dma.done [#allocation15], 128
    $region73: #{tpu_custom_call.1} parent=1 // pred_fallthru
      _
    // Predicated region
    $region74: #{tpu_custom_call.1} parent=1 // pred_check
      _
    $region75: #{tpu_custom_call.1} parent=1 // pred_check_branch
      %408 = sbr.rel (0) target = $region77
    $region76: #{tpu_custom_call.1} parent=1 // pred_region
      %409 = dma.done [#allocation15], 128
    $region77: #{tpu_custom_call.1} parent=1 // pred_fallthru
      _
    %410 = vsyncpa [#allocation6], 1
    %411 = vsyncpa [#allocation9], 1
    %412 = vsyncpa [#allocation12], 1
    %413 = vsyncpa [#allocation7], 1
    %414 = vsyncpa [#allocation15], 1

</llo_original>
